<compile_context>
chip_gen: v7x
topology: tpu7x:2x2x1
jax: 0.10.0
libtpu: 0.0.40
codegen_flags: <defaults>
</compile_context>

<pallas_src>
import functools

import jax
import jax.numpy as jnp
from jax.experimental import pallas as pl
from jax.experimental.pallas import tpu as pltpu


def _round_up(a: int, b: int) -> int:
    return (a + b - 1) // b * b


def _gaussian_kernel(x_ref, w_ref, b_ref, mu_ref, lv_ref, *, z_dim, compute_dtype):
    # (TM, K) @ (K, Npad) + (1, Npad) with f32 accumulation on the MXU.
    x = x_ref[...].astype(compute_dtype)          # cast (if any) in-kernel: VPU has slack
    acc = jnp.dot(x, w_ref[...], preferred_element_type=jnp.float32)
    acc = acc + b_ref[...]
    # Split the fused head in VMEM; stores of width z_dim may be masked vst,
    # which is hidden under the output DMA for this mem-bound kernel.
    mu_ref[...] = acc[:, :z_dim].astype(mu_ref.dtype)
    lv_ref[...] = acc[:, z_dim:2 * z_dim].astype(lv_ref.dtype)


def gaussian_forward(x, w_mu, b_mu, w_var, b_var, *, compute_dtype=None,
                     out_dtype=None, max_row_tile=1024):
    """Fused forward for the PyTorch `Gaussian` module.

    x:     (..., in_dim)                     e.g. (B, T, 1, in_dim)
    w_mu:  (z_dim, in_dim),  b_mu:  (z_dim,) (PyTorch nn.Linear layout)
    w_var: (z_dim, in_dim),  b_var: (z_dim,)

    Returns (mu, logvar) with PyTorch `.squeeze(2)` semantics applied
    (axis 2 dropped iff it has size 1).
    """
    in_dim = x.shape[-1]
    z_dim = w_mu.shape[0]
    lead_shape = x.shape[:-1]

    compute_dtype = compute_dtype or x.dtype
    out_dtype = out_dtype or x.dtype

    # ---- fuse the two heads: W_cat (K, 2*z_dim), b_cat (2*z_dim,) ----
    # One-time, tiny; hoist out of the per-call path if weights are static params.
    w_cat = jnp.concatenate([w_mu.T, w_var.T], axis=1)        # (K, 2*z_dim)
    b_cat = jnp.concatenate([b_mu, b_var], axis=0)             # (2*z_dim,)

    n = 2 * z_dim
    n_pad = _round_up(n, 128)                                  # lane-aligned matmul N
    if n_pad != n:
        w_cat = jnp.pad(w_cat, ((0, 0), (0, n_pad - n)))
        b_cat = jnp.pad(b_cat, (0, n_pad - n))
    w_cat = w_cat.astype(compute_dtype)
    b2d = b_cat.reshape(1, n_pad).astype(jnp.float32)

    # ---- flatten all leading dims into rows; NO padding/cast of x (extra HBM pass) ----
    m = 1
    for d in lead_shape:
        m *= d
    x2 = x.reshape(m, in_dim)

    # Row tile: big (mem-bound), sublane-aligned, capped so the grid has >=2 steps
    # whenever possible (keeps both v7x TensorCores busy). Double-buffered VMEM at
    # tm=1024, in_dim=32, n_pad=128 is ~0.7 MiB -- safe on v5e's 16 MiB scoped VMEM.
    tm = min(max_row_tile, _round_up(m, 8))
    if m > 8:
        tm = min(tm, _round_up(pl.cdiv(m, 2), 8))
    grid = (pl.cdiv(m, tm),)                                   # partial boundary block OK

    kernel = functools.partial(_gaussian_kernel, z_dim=z_dim,
                               compute_dtype=compute_dtype)

    mu2, lv2 = pl.pallas_call(
        kernel,
        out_shape=(jax.ShapeDtypeStruct((m, z_dim), out_dtype),
                   jax.ShapeDtypeStruct((m, z_dim), out_dtype)),
        grid_spec=pltpu.PrefetchScalarGridSpec(
            num_scalar_prefetch=0,
            grid=grid,
            in_specs=[
                pl.BlockSpec((tm, in_dim), lambda i: (i, 0)),      # x row tile
                pl.BlockSpec((in_dim, n_pad), lambda i: (0, 0)),   # fused weight
                pl.BlockSpec((1, n_pad), lambda i: (0, 0)),        # fused bias
            ],
            out_specs=[
                pl.BlockSpec((tm, z_dim), lambda i: (i, 0)),       # mu
                pl.BlockSpec((tm, z_dim), lambda i: (i, 0)),       # logvar
            ],
        ),
        compiler_params=pltpu.CompilerParams(
            dimension_semantics=("parallel",)),   # shards rows across v7x's 2 TCs
    )(x2, w_cat, b2d)

    mu = mu2.reshape(*lead_shape, z_dim)
    logvar = lv2.reshape(*lead_shape, z_dim)

    # PyTorch .squeeze(2): drop axis 2 iff it is size 1.
    if mu.ndim > 2 and mu.shape[2] == 1:
        mu = jnp.squeeze(mu, axis=2)
        logvar = jnp.squeeze(logvar, axis=2)
    return mu, logvar


if __name__ == "__main__":
    # Gaussian(in_dim=32, z_dim=64); x shaped so the module's .squeeze(2) is
    # meaningful: (batch, seq, 1, in_dim).
    in_dim, z_dim = 32, 64
    batch, seq = 2, 8

    key = jax.random.PRNGKey(0)
    kx, k1, k2, k3, k4 = jax.random.split(key, 5)

    x = jax.random.normal(kx, (batch, seq, 1, in_dim), dtype=jnp.float32)

    # Deterministic nn.Linear-style init (uniform with Kaiming bound).
    bound = 1.0 / (in_dim ** 0.5)
    w_mu = jax.random.uniform(k1, (z_dim, in_dim), jnp.float32, -bound, bound)
    b_mu = jax.random.uniform(k2, (z_dim,), jnp.float32, -bound, bound)
    w_var = jax.random.uniform(k3, (z_dim, in_dim), jnp.float32, -bound, bound)
    b_var = jax.random.uniform(k4, (z_dim,), jnp.float32, -bound, bound)

    mu, logvar = gaussian_forward(x, w_mu, b_mu, w_var, b_var)
    mu, logvar = jax.block_until_ready((mu, logvar))

    # Reference in plain JAX (mirrors the PyTorch forward).
    mu_ref = jnp.squeeze(x @ w_mu.T + b_mu[None, :], axis=2)
    lv_ref = jnp.squeeze(x @ w_var.T + b_var[None, :], axis=2)

    assert mu.shape == (batch, seq, z_dim) and logvar.shape == (batch, seq, z_dim)
    assert jnp.allclose(mu, mu_ref, atol=1e-5, rtol=1e-5), "mu mismatch vs reference"
    assert jnp.allclose(logvar, lv_ref, atol=1e-5, rtol=1e-5), "logvar mismatch vs reference"

    print("KERNEL_OK")
</pallas_src>

<mosaic_0001>
module attributes {stable_mosaic.version = 11 : i64} {
  func.func @_gaussian_kernel(%arg0: i32, %arg1: memref<8x32xf32, #tpu.memory_space<vmem>>, %arg2: memref<32x128xf32, #tpu.memory_space<vmem>>, %arg3: memref<1x128xf32, #tpu.memory_space<vmem>>, %arg4: memref<8x64xf32, #tpu.memory_space<vmem>>, %arg5: memref<8x64xf32, #tpu.memory_space<vmem>>) attributes {dimension_semantics = [#tpu.dimension_semantics<parallel>], iteration_bounds = array<i64: 2>, scalar_prefetch = 0 : i64, scratch_operands = 0 : i64, tpu.core_type = #tpu.core_type<tc>, window_params = [{transform_indices = @transform_0, window_bounds = array<i64: 8, 32>}, {pipeline_mode = #tpu.pipeline_mode<synchronous>, transform_indices = @transform_1, window_bounds = array<i64: 32, 128>}, {pipeline_mode = #tpu.pipeline_mode<synchronous>, transform_indices = @transform_2, window_bounds = array<i64: 1, 128>}, {transform_indices = @transform_3, window_bounds = array<i64: 8, 64>}, {transform_indices = @transform_4, window_bounds = array<i64: 8, 64>}]} {
    %c0 = arith.constant 0 : index
    %c0_0 = arith.constant 0 : index
    %0 = vector.load %arg1[%c0, %c0_0] : memref<8x32xf32, #tpu.memory_space<vmem>>, vector<8x32xf32>
    %c0_1 = arith.constant 0 : index
    %c0_2 = arith.constant 0 : index
    %1 = vector.load %arg2[%c0_1, %c0_2] : memref<32x128xf32, #tpu.memory_space<vmem>>, vector<32x128xf32>
    %cst = arith.constant dense<0.000000e+00> : vector<8x128xf32>
    %2 = tpu.matmul %0, %1, %cst {dimension_numbers = #tpu.dot_dimension_numbers<[1], [0], [0], [1], [0, 0, 1, 1], [], []>} : vector<8x32xf32>, vector<32x128xf32>, vector<8x128xf32> -> vector<8x128xf32>
    %c0_3 = arith.constant 0 : index
    %c0_4 = arith.constant 0 : index
    %3 = vector.load %arg3[%c0_3, %c0_4] : memref<1x128xf32, #tpu.memory_space<vmem>>, vector<1x128xf32>
    %4 = vector.broadcast %3 : vector<1x128xf32> to vector<8x128xf32>
    %5 = arith.addf %2, %4 : vector<8x128xf32>
    %6 = vector.extract_strided_slice %5 {offsets = [0, 0], sizes = [8, 64], strides = [1, 1]} : vector<8x128xf32> to vector<8x64xf32>
    %c0_5 = arith.constant 0 : index
    %c0_6 = arith.constant 0 : index
    %7 = vector.load %arg4[%c0_5, %c0_6] : memref<8x64xf32, #tpu.memory_space<vmem>>, vector<8x64xf32>
    tpu.vector_store %arg4[%c0_5, %c0_6], %6 {strides = array<i32>} : memref<8x64xf32, #tpu.memory_space<vmem>>, vector<8x64xf32>,
    %8 = vector.extract_strided_slice %5 {offsets = [0, 64], sizes = [8, 64], strides = [1, 1]} : vector<8x128xf32> to vector<8x64xf32>
    %c0_7 = arith.constant 0 : index
    %c0_8 = arith.constant 0 : index
    %9 = vector.load %arg5[%c0_7, %c0_8] : memref<8x64xf32, #tpu.memory_space<vmem>>, vector<8x64xf32>
    tpu.vector_store %arg5[%c0_7, %c0_8], %8 {strides = array<i32>} : memref<8x64xf32, #tpu.memory_space<vmem>>, vector<8x64xf32>,
    return
  }
  func.func @transform_0(%arg0: i32) -> (i32, i32) {
    %c0_i32 = arith.constant 0 : i32
    %c0_i32_0 = arith.constant 0 : i32
    return %arg0, %c0_i32 : i32, i32
  }
  func.func @transform_1(%arg0: i32) -> (i32, i32) {
    %c0_i32 = arith.constant 0 : i32
    %c0_i32_0 = arith.constant 0 : i32
    %c0_i32_1 = arith.constant 0 : i32
    return %c0_i32, %c0_i32_0 : i32, i32
  }
  func.func @transform_2(%arg0: i32) -> (i32, i32) {
    %c0_i32 = arith.constant 0 : i32
    %c0_i32_0 = arith.constant 0 : i32
    %c0_i32_1 = arith.constant 0 : i32
    return %c0_i32, %c0_i32_0 : i32, i32
  }
  func.func @transform_3(%arg0: i32) -> (i32, i32) {
    %c0_i32 = arith.constant 0 : i32
    %c0_i32_0 = arith.constant 0 : i32
    return %arg0, %c0_i32 : i32, i32
  }
  func.func @transform_4(%arg0: i32) -> (i32, i32) {
    %c0_i32 = arith.constant 0 : i32
    %c0_i32_0 = arith.constant 0 : i32
    return %arg0, %c0_i32 : i32, i32
  }
}

</mosaic_0001>

<llo_original>
// kernel: tpu_custom_call.1
$region0: #{tpu_custom_call.1}
  #allocation0 [shape = 'u32[]', space=smem, size = 0x4, offset = 0x4, fixed_abs, tag = 'smem constant byte address 0x4 - core index']
  #allocation1 [shape = 'u32[144,128]{1,0:T(1,128)}', space=vmem, size = 0x12000, scoped, tag = 'internal scratch']
  %s0 = inlined_call_operand.hbm [shape: f32[16,32], index: 0, kind: input, shape index: {}]
  %s1 = inlined_call_operand.hbm [shape: f32[32,128], index: 1, kind: input, shape index: {}]
  %s2 = inlined_call_operand.vmem [shape: f32[1,128], index: 2, kind: input, shape index: {}]
  %s3 = inlined_call_operand.hbm [shape: f32[16,64], index: 3, kind: output, shape index: {0}]
  %s4 = inlined_call_operand.hbm [shape: f32[16,64], index: 4, kind: output, shape index: {1}]
  %5 = xla_tuple %s3, %s4
  %s6 = sld [smem:[#allocation0]]
  $region61: #{tpu_custom_call.1} parent=0
    _
  %s8 = ssub.s32 1, %s6
  %s9 = scalar_select 0, %s8, %s6
  $region1: #{tpu_custom_call.1} parent=0
    #allocation2 [shape = 'u8[8192]{0}', space=vmem, size = 0x2000, scoped, tag = 'input window, operand 0']
    #allocation3 [shape = 's32[2]{0}', space=sflag, size = 0x8, scoped, tag = 'scoped memory for tpu_custom_call.1']
    #allocation4 [shape = 's32[2]{0}', space=sflag, size = 0x8, scoped, tag = 'scoped memory for tpu_custom_call.1']
    #allocation5 [shape = 'u8[16384]{0}', space=vmem, size = 0x4000, scoped, tag = 'input window, operand 1, single buffered']
    #allocation6 [shape = 's32[1]{0}', space=sflag, size = 0x4, scoped, tag = 'scoped memory for tpu_custom_call.1']
    #allocation7 [shape = 'u8[8192]{0}', space=vmem, size = 0x2000, scoped, tag = 'output window, operand 0']
    #allocation8 [shape = 'u8[8192]{0}', space=vmem, size = 0x2000, scoped, tag = 'output window, operand 1']
    #allocation9 [shape = 's32[2]{0}', space=sflag, size = 0x8, scoped, tag = 'scoped memory for tpu_custom_call.1']
    %10 = vsyncpa [#allocation3], 0
    %s11 = scalar_lea.sflag [#allocation3], 1
    %12 = vsyncpa %s11, 0
    %13 = vsyncpa [#allocation6], 0
    %14 = vsyncpa [#allocation4], 0
    %s15 = scalar_lea.sflag [#allocation4], 1
    %16 = vsyncpa %s15, 0
    %17 = vsyncpa [#allocation9], 0
    %s18 = scalar_lea.sflag [#allocation9], 1
    %19 = vsyncpa %s18, 0
    loop: start=0, step=1, limit=4
    $region2: #{tpu_custom_call.1} parent=1 // loop_pre_header
      _
    $region3: #{tpu_custom_call.1} parent=1 // loop_header
      %s21 = sphi 0, %s25
      %p22 = scmp.ge.s32.totalorder %s21, 4
      %s31 = sphi 0, %s33
      %s34 = sphi 0, %s31
      %s35 = sphi 0, %s34
      %s51 = sphi 0, %s35
      %s55 = sphi 0, %s55
      %s57 = sphi 0, %s55
      %s58 = sphi 0, %s57
      %s72 = sphi 0, %s58
      %s76 = sphi 0, %s76
      %s78 = sphi 0, %s76
      %s79 = sphi 0, %s78
      %s93 = sphi 0, %s79
      %s99 = sphi 0, %s101
      %s102 = sphi 0, %s99
      %s103 = sphi 0, %s102
      %s119 = sphi 0, %s103
      %s125 = sphi 0, %s127
      %s128 = sphi 0, %s125
      %s129 = sphi 0, %s128
      %s145 = sphi 0, %s129
    $region4: #{tpu_custom_call.1} parent=1 // loop_header_branch
      %24 = sbr.rel (%p22) target = $region8
    $region5: #{tpu_custom_call.1} parent=1 // loop_body
      %s26 = ssub.s32 %s21, 1
      %s27 = ssub.s32 %s21, 2
      %s28 = sadd.s32 %s21, 1
      %s29 = ssub.s32 %s21, %s28
      %p30 = scmp.eq.s32.totalorder %s29, 0
      %s32 = sadd.s32 %s31, 1
      %s33 = scalar_select %p30, %s31, %s32
      %p36 = pneg %p30
      %p37 = scmp.eq.s32.totalorder %s21, 1
      %p38 = por %p36, %p37
      %p39 = scmp.ne.s32.totalorder %s31, %s34
      %p40 = scmp.eq.s32.totalorder %s21, 0
      %p41 = por %p39, %p40
      %p42 = scmp.ne.s32.totalorder %s31, %s34
      %p43 = scmp.eq.s32.totalorder %s26, 1
      %p44 = por %p42, %p43
      %p45 = scmp.ne.s32.totalorder %s34, %s35
      %p46 = scmp.eq.s32.totalorder %s26, 0
      %p47 = por %p45, %p46
      %p48 = scmp.ne.s32.totalorder %s34, %s35
      %p49 = scmp.eq.s32.totalorder %s27, 1
      %p50 = por %p48, %p49
      %p52 = scmp.ne.s32.totalorder %s35, %s51
      %p53 = scmp.eq.s32.totalorder %s27, 0
      %p54 = por %p52, %p53
      %s56 = sadd.s32 %s55, 1
      %p59 = scmp.eq.s32.totalorder %s21, 1
      %p60 = scmp.ne.s32.totalorder %s55, %s57
      %p61 = scmp.eq.s32.totalorder %s21, 0
      %p62 = por %p60, %p61
      %p63 = scmp.ne.s32.totalorder %s55, %s57
      %p64 = scmp.eq.s32.totalorder %s26, 1
      %p65 = por %p63, %p64
      %p66 = scmp.ne.s32.totalorder %s57, %s58
      %p67 = scmp.eq.s32.totalorder %s26, 0
      %p68 = por %p66, %p67
      %p69 = scmp.ne.s32.totalorder %s57, %s58
      %p70 = scmp.eq.s32.totalorder %s27, 1
      %p71 = por %p69, %p70
      %p73 = scmp.ne.s32.totalorder %s58, %s72
      %p74 = scmp.eq.s32.totalorder %s27, 0
      %p75 = por %p73, %p74
      %s77 = sadd.s32 %s76, 1
      %p80 = scmp.eq.s32.totalorder %s21, 1
      %p81 = scmp.ne.s32.totalorder %s76, %s78
      %p82 = scmp.eq.s32.totalorder %s21, 0
      %p83 = por %p81, %p82
      %p84 = scmp.ne.s32.totalorder %s76, %s78
      %p85 = scmp.eq.s32.totalorder %s26, 1
      %p86 = por %p84, %p85
      %p87 = scmp.ne.s32.totalorder %s78, %s79
      %p88 = scmp.eq.s32.totalorder %s26, 0
      %p89 = por %p87, %p88
      %p90 = scmp.ne.s32.totalorder %s78, %s79
      %p91 = scmp.eq.s32.totalorder %s27, 1
      %p92 = por %p90, %p91
      %p94 = scmp.ne.s32.totalorder %s79, %s93
      %p95 = scmp.eq.s32.totalorder %s27, 0
      %p96 = por %p94, %p95
      %s97 = ssub.s32 %s21, %s28
      %p98 = scmp.eq.s32.totalorder %s97, 0
      %s100 = sadd.s32 %s99, 1
      %s101 = scalar_select %p98, %s99, %s100
      %p104 = pneg %p98
      %p105 = scmp.eq.s32.totalorder %s21, 1
      %p106 = por %p104, %p105
      %p107 = scmp.ne.s32.totalorder %s99, %s102
      %p108 = scmp.eq.s32.totalorder %s21, 0
      %p109 = por %p107, %p108
      %p110 = scmp.ne.s32.totalorder %s99, %s102
      %p111 = scmp.eq.s32.totalorder %s26, 1
      %p112 = por %p110, %p111
      %p113 = scmp.ne.s32.totalorder %s102, %s103
      %p114 = scmp.eq.s32.totalorder %s26, 0
      %p115 = por %p113, %p114
      %p116 = scmp.ne.s32.totalorder %s102, %s103
      %p117 = scmp.eq.s32.totalorder %s27, 1
      %p118 = por %p116, %p117
      %p120 = scmp.ne.s32.totalorder %s103, %s119
      %p121 = scmp.eq.s32.totalorder %s27, 0
      %p122 = por %p120, %p121
      %s123 = ssub.s32 %s21, %s28
      %p124 = scmp.eq.s32.totalorder %s123, 0
      %s126 = sadd.s32 %s125, 1
      %s127 = scalar_select %p124, %s125, %s126
      %p130 = pneg %p124
      %p131 = scmp.eq.s32.totalorder %s21, 1
      %p132 = por %p130, %p131
      %p133 = scmp.ne.s32.totalorder %s125, %s128
      %p134 = scmp.eq.s32.totalorder %s21, 0
      %p135 = por %p133, %p134
      %p136 = scmp.ne.s32.totalorder %s125, %s128
      %p137 = scmp.eq.s32.totalorder %s26, 1
      %p138 = por %p136, %p137
      %p139 = scmp.ne.s32.totalorder %s128, %s129
      %p140 = scmp.eq.s32.totalorder %s26, 0
      %p141 = por %p139, %p140
      %p142 = scmp.ne.s32.totalorder %s128, %s129
      %p143 = scmp.eq.s32.totalorder %s27, 1
      %p144 = por %p142, %p143
      %p146 = scmp.ne.s32.totalorder %s129, %s145
      %p147 = scmp.eq.s32.totalorder %s27, 0
      %p148 = por %p146, %p147
      %p149 = scmp.le.s32.totalorder 1, %s21
      %p150 = scmp.lt.s32.totalorder %s21, 3
      %p151 = pnand %p149, %p150
      %p152 = pneg %p151
      // Predicated region
      $region9: #{tpu_custom_call.1} parent=5 // pred_check
        _
      $region10: #{tpu_custom_call.1} parent=5 // pred_check_branch
        %154 = sbr.rel (%p151) target = $region12
      $region11: #{tpu_custom_call.1} parent=5 // pred_region
        %s155 = ssub.s32 %s21, 1
        // Predicated region
        $region13: #{tpu_custom_call.1} parent=11 // pred_check
          %p156 = pneg %p68
        $region14: #{tpu_custom_call.1} parent=11 // pred_check_branch
          %158 = sbr.rel (%p156) target = $region16
        $region15: #{tpu_custom_call.1} parent=11 // pred_region
          %s160 = ssub.s32 512, 512
          %161 = vsyncadd [#allocation6], %s160
          %s162 = sshll.u32 [#allocation5], 4
          %s163 = int_to_ptr.vmem [resolvable:$true] %s162
          %168 = dma.hbm_to_vmem [thread:$0]  %s1, 512, %s163, [#allocation6], 128, 128, 8
        $region16: #{tpu_custom_call.1} parent=11 // pred_fallthru
          _
        // Predicated region
        $region17: #{tpu_custom_call.1} parent=11 // pred_check
          %p169 = pneg %p89
        $region18: #{tpu_custom_call.1} parent=11 // pred_check_branch
          %171 = sbr.rel (%p169) target = $region20
        $region19: #{tpu_custom_call.1} parent=11 // pred_region
          _
        $region20: #{tpu_custom_call.1} parent=11 // pred_fallthru
          _
      $region12: #{tpu_custom_call.1} parent=5 // pred_fallthru
        _
      %p172 = scmp.lt.s32.totalorder %s21, 2
      // Predicated region
      $region21: #{tpu_custom_call.1} parent=5 // pred_check
        %p173 = pneg %p172
      $region22: #{tpu_custom_call.1} parent=5 // pred_check_branch
        %175 = sbr.rel (%p173) target = $region24
      $region23: #{tpu_custom_call.1} parent=5 // pred_region
        // Predicated region
        $region25: #{tpu_custom_call.1} parent=23 // pred_check
          %p176 = pneg %p41
        $region26: #{tpu_custom_call.1} parent=23 // pred_check_branch
          %178 = sbr.rel (%p176) target = $region28
        $region27: #{tpu_custom_call.1} parent=23 // pred_region
          %s179 = sand.u32 %s31, 1
          %s180 = scalar_lea.sflag [#allocation3], %s179
          %s181 = sand.u32 %s31, 1
          %s182 = smul.addr %s181, 8
          %s183 = scalar_lea.vmem [#allocation2], %s182
          %s185 = ssub.s32 128, 128
          %186 = vsyncadd %s180, %s185
          %s187 = smul.addr %s21, 128
          %s188 = scalar_lea.hbm %s0, %s187
          %s190 = sshll.u32 %s183, 4
          %s191 = int_to_ptr.vmem [resolvable:$true] %s190
          %193 = dma.hbm_to_vmem [thread:$0]  %s188, 128, %s191, %s180
        $region28: #{tpu_custom_call.1} parent=23 // pred_fallthru
          _
      $region24: #{tpu_custom_call.1} parent=5 // pred_fallthru
        _
      %p194 = scmp.le.s32.totalorder 1, %s21
      %p195 = scmp.lt.s32.totalorder %s21, 3
      %p196 = pnand %p194, %p195
      %p197 = pneg %p196
      // Predicated region
      $region29: #{tpu_custom_call.1} parent=5 // pred_check
        _
      $region30: #{tpu_custom_call.1} parent=5 // pred_check_branch
        %199 = sbr.rel (%p196) target = $region32
      $region31: #{tpu_custom_call.1} parent=5 // pred_region
        %s200 = ssub.s32 %s21, 1
        %s201 = sand.u32 %s34, 1
        %s202 = scalar_lea.sflag [#allocation3], %s201
        %s203 = sand.u32 %s34, 1
        %s204 = smul.addr %s203, 8
        %s205 = scalar_lea.vmem [#allocation2], %s204
        // Predicated region
        $region33: #{tpu_custom_call.1} parent=31 // pred_check
          %p206 = pneg %p47
        $region34: #{tpu_custom_call.1} parent=31 // pred_check_branch
          %208 = sbr.rel (%p206) target = $region36
        $region35: #{tpu_custom_call.1} parent=31 // pred_region
          %209 = dma.done %s202, 128
        $region36: #{tpu_custom_call.1} parent=31 // pred_fallthru
          _
        // Predicated region
        $region37: #{tpu_custom_call.1} parent=31 // pred_check
          %p210 = pneg %p68
        $region38: #{tpu_custom_call.1} parent=31 // pred_check_branch
          %212 = sbr.rel (%p210) target = $region40
        $region39: #{tpu_custom_call.1} parent=31 // pred_region
          %213 = dma.done [#allocation6], 512
        $region40: #{tpu_custom_call.1} parent=31 // pred_fallthru
          _
        %s214 = sand.u32 %s34, 1
        %s215 = scalar_lea.sflag [#allocation3], %s214
        %s216 = sand.u32 %s34, 1
        %s217 = smul.addr %s216, 8
        %s218 = scalar_lea.vmem [#allocation2], %s217
        %p219 = pneg %p47
        %p220 = pneg %p44
        %p221 = pneg %p68
        %p222 = pneg %p65
        %p223 = pneg %p89
        %p224 = pneg %p86
        %p225 = pneg %p115
        %p226 = pneg %p112
        %s227 = sand.u32 %s102, 1
        %s228 = scalar_lea.sflag [#allocation4], %s227
        %s229 = sand.u32 %s102, 1
        %s230 = smul.addr %s229, 8
        %s231 = scalar_lea.vmem [#allocation7], %s230
        %p232 = pneg %p141
        %p233 = pneg %p138
        %s234 = sand.u32 %s128, 1
        %s235 = scalar_lea.sflag [#allocation9], %s234
        %s236 = sand.u32 %s128, 1
        %s237 = smul.addr %s236, 8
        %s238 = scalar_lea.vmem [#allocation8], %s237
        %v239 = vld [vmem:[%s205] sm:$0xff]
        %v240 = vld [vmem:[#allocation5] sm:$0xff]
        %v241 = vld [vmem:[#allocation5 + $0x8] sm:$0xff]
        %v242 = vld [vmem:[#allocation5 + $0x10] sm:$0xff]
        %v243 = vld [vmem:[#allocation5 + $0x18] sm:$0xff]
        %v244 = vld [vmem:[%s2] sm:$0x1]
        %v246 = vlaneseq
        %v247 = vshrl.u32 %v246, 7
        %v248 = vsub.s32 0, %v247
        %v249 = vrot.slane %v244, %v248
        %vm251 = vcmask 261120
        %v253 = vsel %vm251, %v239, 0
        %255 = vmatprep.subr.mxu0 0.0
        %256 = vmatpush1.msra.mxu0 %v240
        %257 = vmatprep.subr.mxu0 0.0
        %258 = vmatpush1.msra.mxu0 %v241
        %259 = vmatprep.subr.mxu0 0.0
        %260 = vmatpush1.msra.mxu0 %v242
        %261 = vmatprep.subr.mxu0 0.0
        %262 = vmatpush1.msra.mxu0 %v243
        %263 = vmatprep.subr.mxu0 0.0
        %264 = vmatpush1.msra.mxu0 0.0
        %265 = vmatprep.subr.mxu0 0.0
        %266 = vmatpush1.msra.mxu0 0.0
        %267 = vmatprep.subr.mxu0 0.0
        %268 = vmatpush1.msra.mxu0 0.0
        %269 = vmatprep.subr.mxu0 0.0
        %270 = vmatpush1.msra.mxu0 0.0
        %271 = vmatprep.subr.mxu0 0.0
        %272 = vmatpush1.msra.mxu0 0.0
        %273 = vmatprep.subr.mxu0 0.0
        %274 = vmatpush1.msra.mxu0 0.0
        %275 = vmatprep.subr.mxu0 0.0
        %276 = vmatpush1.msra.mxu0 0.0
        %277 = vmatprep.subr.mxu0 0.0
        %278 = vmatpush1.msra.mxu0 0.0
        %279 = vmatprep.subr.mxu0 0.0
        %280 = vmatpush1.msra.mxu0 0.0
        %281 = vmatprep.subr.mxu0 0.0
        %282 = vmatpush1.msra.mxu0 0.0
        %283 = vmatprep.subr.mxu0 0.0
        %284 = vmatpush1.msra.mxu0 0.0
        %285 = vmatprep.subr.mxu0 0.0
        %286 = vmatpush1.msra.mxu0 0.0
        %287 = vmatprep.subr.mxu0 0.0
        %288 = vmatpush1.msra.mxu0 0.0
        %289 = vmatprep.subr.mxu0 0.0
        %290 = vmatpush1.msra.mxu0 0.0
        %291 = vmatprep.subr.mxu0 0.0
        %292 = vmatpush1.msra.mxu0 0.0
        %293 = vmatprep.subr.mxu0 0.0
        %294 = vmatpush1.msra.mxu0 0.0
        %295 = vmatprep.subr.mxu0 0.0
        %296 = vmatpush1.msra.mxu0 0.0
        %297 = vmatprep.subr.mxu0 0.0
        %298 = vmatpush1.msra.mxu0 0.0
        %299 = vmatprep.subr.mxu0 0.0
        %300 = vmatpush1.msra.mxu0 0.0
        %301 = vmatprep.subr.mxu0 0.0
        %302 = vmatpush1.msra.mxu0 0.0
        %303 = vmatprep.subr.mxu0 0.0
        %304 = vmatpush1.msra.mxu0 0.0
        %305 = vmatprep.subr.mxu0 0.0
        %306 = vmatpush1.msra.mxu0 0.0
        %307 = vmatprep.subr.mxu0 0.0
        %308 = vmatpush1.msra.mxu0 0.0
        %309 = vmatprep.subr.mxu0 0.0
        %310 = vmatpush1.msra.mxu0 0.0
        %311 = vmatprep.subr.mxu0 0.0
        %312 = vmatpush1.msra.mxu0 0.0
        %313 = vmatprep.subr.mxu0 0.0
        %314 = vmatpush1.msra.mxu0 0.0
        %315 = vmatprep.subr.mxu0 0.0
        %316 = vmatpush1.msra.mxu0 0.0
        %317 = vmatprep.subr.mxu0 0.0
        %318 = vmatpush1.msra.mxu0 0.0
        %319 = vmatprep.mubr.f32.mxu0 0.0
        %320 = vmatmul.mubr.f32.gmra.mrb[0].mxu0 %v253
        %v321 = vpop.f32.mrb[0].mxu0
        %v322 = vadd.f32 %v249, %v321
        %v323 = vpop.f32.mrb[0].mxu0
        %324 = vdwg.mxu0
        %vm325 = vcmask 523264
        %326 = vst.msk [vmem:[%s231] sm:$0xff] %vm325, %v322
        %328 = vrot.lane.b32.xlu0 %v322, 64
        %v329 = vpop.permute.xlu0 %328
        %331 = vst.msk [vmem:[%s238] sm:$0xff] %vm325, %v329
        %s332 = sand.u32 %s102, 1
        %s333 = scalar_lea.sflag [#allocation4], %s332
        %s334 = sand.u32 %s102, 1
        %s335 = smul.addr %s334, 8
        %s336 = scalar_lea.vmem [#allocation7], %s335
        %s337 = sand.u32 %s128, 1
        %s338 = scalar_lea.sflag [#allocation9], %s337
        %s339 = sand.u32 %s128, 1
        %s340 = smul.addr %s339, 8
        %s341 = scalar_lea.vmem [#allocation8], %s340
        // Predicated region
        $region41: #{tpu_custom_call.1} parent=31 // pred_check
          %p342 = pneg %p112
        $region42: #{tpu_custom_call.1} parent=31 // pred_check_branch
          %344 = sbr.rel (%p342) target = $region44
        $region43: #{tpu_custom_call.1} parent=31 // pred_region
          %s346 = ssub.s32 128, 128
          %347 = vsyncadd %s333, %s346
          %s348 = smul.addr %s26, 128
          %s349 = scalar_lea.hbm %s3, %s348
          %s351 = sshll.u32 %s336, 4
          %s352 = int_to_ptr.vmem [resolvable:$true] %s351
          %354 = dma.vmem_to_hbm [thread:$0]  %s352, 128, %s349, %s333
        $region44: #{tpu_custom_call.1} parent=31 // pred_fallthru
          _
        // Predicated region
        $region45: #{tpu_custom_call.1} parent=31 // pred_check
          %p355 = pneg %p138
        $region46: #{tpu_custom_call.1} parent=31 // pred_check_branch
          %357 = sbr.rel (%p355) target = $region48
        $region47: #{tpu_custom_call.1} parent=31 // pred_region
          %s359 = ssub.s32 128, 128
          %360 = vsyncadd %s338, %s359
          %s361 = smul.addr %s26, 128
          %s362 = scalar_lea.hbm %s4, %s361
          %s364 = sshll.u32 %s341, 4
          %s365 = int_to_ptr.vmem [resolvable:$true] %s364
          %367 = dma.vmem_to_hbm [thread:$0]  %s365, 128, %s362, %s338
        $region48: #{tpu_custom_call.1} parent=31 // pred_fallthru
          _
      $region32: #{tpu_custom_call.1} parent=5 // pred_fallthru
        _
      %p368 = scmp.le.s32.totalorder 2, %s21
      // Predicated region
      $region49: #{tpu_custom_call.1} parent=5 // pred_check
        %p369 = pneg %p368
      $region50: #{tpu_custom_call.1} parent=5 // pred_check_branch
        %371 = sbr.rel (%p369) target = $region52
      $region51: #{tpu_custom_call.1} parent=5 // pred_region
        %s372 = ssub.s32 %s21, 2
        // Predicated region
        $region53: #{tpu_custom_call.1} parent=51 // pred_check
          %p373 = pneg %p118
        $region54: #{tpu_custom_call.1} parent=51 // pred_check_branch
          %375 = sbr.rel (%p373) target = $region56
        $region55: #{tpu_custom_call.1} parent=51 // pred_region
          %s376 = sand.u32 %s103, 1
          %s377 = scalar_lea.sflag [#allocation4], %s376
          %s378 = sand.u32 %s103, 1
          %s379 = smul.addr %s378, 8
          %s380 = scalar_lea.vmem [#allocation7], %s379
          %381 = dma.done %s377, 128
        $region56: #{tpu_custom_call.1} parent=51 // pred_fallthru
          _
        // Predicated region
        $region57: #{tpu_custom_call.1} parent=51 // pred_check
          %p382 = pneg %p144
        $region58: #{tpu_custom_call.1} parent=51 // pred_check_branch
          %384 = sbr.rel (%p382) target = $region60
        $region59: #{tpu_custom_call.1} parent=51 // pred_region
          %s385 = sand.u32 %s129, 1
          %s386 = scalar_lea.sflag [#allocation9], %s385
          %s387 = sand.u32 %s129, 1
          %s388 = smul.addr %s387, 8
          %s389 = scalar_lea.vmem [#allocation8], %s388
          %390 = dma.done %s386, 128
        $region60: #{tpu_custom_call.1} parent=51 // pred_fallthru
          _
      $region52: #{tpu_custom_call.1} parent=5 // pred_fallthru
        _
    $region6: #{tpu_custom_call.1} parent=1 // loop_footer
      %s25 = sadd.s32 1, %s21
    $region7: #{tpu_custom_call.1} parent=1 // loop_footer_branch
      %20 = sbr.rel target = $region3
    $region8: #{tpu_custom_call.1} parent=1 // loop_exit
      _
    %391 = vsyncpa [#allocation3], 1
    %s392 = scalar_lea.sflag [#allocation3], 1
    %393 = vsyncpa %s392, 1
    %394 = vsyncpa [#allocation6], 1
    %395 = vsyncpa [#allocation4], 1
    %s396 = scalar_lea.sflag [#allocation4], 1
    %397 = vsyncpa %s396, 1
    %398 = vsyncpa [#allocation9], 1
    %s399 = scalar_lea.sflag [#allocation9], 1
    %400 = vsyncpa %s399, 1

</llo_original>
